<compile_context>
chip_gen: v6e
topology: v6e:2x2x1
jax: 0.10.0
libtpu: 0.0.40
codegen_flags: <defaults>
</compile_context>

<pallas_src>
import jax
import jax.numpy as jnp
from jax.experimental import pallas as pl
from jax.experimental.pallas import tpu as pltpu


def _bond_potential_kernel(bc_ref, u_ref, o_ref):
    # bc_ref: (2, D) VMEM, u_ref: (tile_n, D) VMEM, o_ref: (1, tile_n) VMEM.
    kw = bc_ref[0:1, :] * 0.5          # (1, D) -- fold the /2 into the weights
    r0 = bc_ref[1:2, :]                # (1, D)
    diff = u_ref[...] - r0             # (tile_n, D)  VPU
    sq = diff * diff                   # (tile_n, D)  VPU
    # (1, D) x (tile_n, D) contracted over D on the otherwise-idle MXU
    # -> (1, tile_n): performs the reduction AND yields a lane-dense row.
    pot = jax.lax.dot_general(
        kw, sq,
        dimension_numbers=(((1,), (1,)), ((), ())),
        preferred_element_type=jnp.float32,
    )
    o_ref[...] = pot.astype(o_ref.dtype)


def _auto_tile_n(N, D, *, max_tile=2048, u_vmem_budget=8 << 20):
    """Largest lane-aligned row tile whose double-buffered U footprint stays
    comfortably inside the scoped VMEM limit on v5e/v6e/v7x."""
    d_pad = ((max(D, 1) + 127) // 128) * 128          # lanes round up to 128
    rows_by_vmem = u_vmem_budget // (2 * 4 * d_pad)   # 2 pipeline buffers, f32
    tile = max(128, min(max_tile, (rows_by_vmem // 128) * 128))
    n_pad = ((N + 127) // 128) * 128
    tile = min(tile, n_pad)
    # Keep >= 2 grid steps when possible so both v7x TensorCores get work.
    if n_pad // tile < 2 and n_pad >= 256:
        tile = max(128, ((n_pad // 2) // 128) * 128)
    return tile


def bond_potential(U, BondConst, *, tile_n=None):
    """Pallas implementation of bondPotential.forward.

    U:         (N, D) float32
    BondConst: (2, D) float32
    returns    (N, 1) float32
    """
    N, D = U.shape
    assert BondConst.shape == (2, D)

    if tile_n is None:
        tile_n = _auto_tile_n(N, D)
    assert tile_n % 128 == 0, "tile_n must be lane-aligned (multiple of 128)"

    num_tiles = pl.cdiv(N, tile_n)
    n_pad = num_tiles * tile_n
    if n_pad != N:
        # Zero-pad the sample axis; padded rows are sliced off below.
        U = jnp.pad(U, ((0, n_pad - N), (0, 0)))

    # TODO(synk): for D << 128, packing p=128//D samples per lane row would
    # cut VMEM padding and VPU work by ~4x at D=32; omitted for simplicity.
    out_row = pl.pallas_call(
        _bond_potential_kernel,
        out_shape=jax.ShapeDtypeStruct((1, n_pad), jnp.float32),
        grid_spec=pltpu.PrefetchScalarGridSpec(
            num_scalar_prefetch=0,
            grid=(num_tiles,),
            in_specs=[
                # Tiny (2, D) constants, broadcast to every grid step.
                pl.BlockSpec((2, D), lambda i: (0, 0)),
                # Large U row tile, streamed through the auto-pipeline.
                pl.BlockSpec((tile_n, D), lambda i: (i, 0)),
            ],
            # Lane-dense output block: full-lane unmasked stores.
            out_specs=pl.BlockSpec((1, tile_n), lambda i: (0, i)),
        ),
        compiler_params=pltpu.CompilerParams(
            dimension_semantics=("parallel",),
            vmem_limit_bytes=32 * 1024 * 1024,
        ),
    )(BondConst, U)

    return out_row[0, :N].reshape(N, 1)


def bond_potential_ref(U, BondConst):
    # Pure-JAX reference, mirrors the torch code line-for-line.
    n = U.shape[0]
    return (jnp.sum(BondConst[0, :] * (U - BondConst[1, :]) ** 2, axis=1)
            .reshape(n, 1) / 2)


if __name__ == "__main__":
    key = jax.random.PRNGKey(0)
    k_u, k_k, k_r0 = jax.random.split(key, 3)

    N, D = 16, 32  # small shapes: 16 configurations, 32 bonds
    U = jax.random.normal(k_u, (N, D), dtype=jnp.float32)
    # Deterministic synthetic bond constants: positive k, equilibrium lengths r0.
    BondConst = jnp.stack(
        [
            jax.random.uniform(k_k, (D,), dtype=jnp.float32, minval=0.5, maxval=2.0),
            jax.random.uniform(k_r0, (D,), dtype=jnp.float32, minval=-1.0, maxval=1.0),
        ],
        axis=0,
    )

    out = jax.block_until_ready(bond_potential(U, BondConst))
    ref = bond_potential_ref(U, BondConst)

    assert out.shape == (N, 1)
    assert jnp.allclose(out, ref, atol=1e-5, rtol=1e-5), "mismatch vs reference"

    print("KERNEL_OK")
</pallas_src>

<mosaic_0001>
module attributes {stable_mosaic.version = 11 : i64} {
  func.func @_bond_potential_kernel(%arg0: i32, %arg1: memref<2x32xf32, #tpu.memory_space<vmem>>, %arg2: memref<128x32xf32, #tpu.memory_space<vmem>>, %arg3: memref<1x128xf32, #tpu.memory_space<vmem>>) attributes {dimension_semantics = [#tpu.dimension_semantics<parallel>], iteration_bounds = array<i64: 1>, scalar_prefetch = 0 : i64, scratch_operands = 0 : i64, tpu.core_type = #tpu.core_type<tc>, window_params = [{pipeline_mode = #tpu.pipeline_mode<synchronous>, transform_indices = @transform_0, window_bounds = array<i64: 2, 32>}, {transform_indices = @transform_1, window_bounds = array<i64: 128, 32>}, {transform_indices = @transform_2, window_bounds = array<i64: 1, 128>}]} {
    %c0 = arith.constant 0 : index
    %c0_0 = arith.constant 0 : index
    %0 = vector.load %arg1[%c0, %c0_0] : memref<2x32xf32, #tpu.memory_space<vmem>>, vector<1x32xf32>
    %cst = arith.constant 5.000000e-01 : f32
    %1 = vector.broadcast %cst : f32 to vector<1x32xf32>
    %2 = arith.mulf %0, %1 : vector<1x32xf32>
    %c1 = arith.constant 1 : index
    %c0_1 = arith.constant 0 : index
    %3 = vector.load %arg1[%c1, %c0_1] : memref<2x32xf32, #tpu.memory_space<vmem>>, vector<1x32xf32>
    %c0_2 = arith.constant 0 : index
    %c0_3 = arith.constant 0 : index
    %4 = vector.load %arg2[%c0_2, %c0_3] : memref<128x32xf32, #tpu.memory_space<vmem>>, vector<128x32xf32>
    %5 = vector.broadcast %3 : vector<1x32xf32> to vector<128x32xf32>
    %6 = arith.subf %4, %5 : vector<128x32xf32>
    %7 = arith.mulf %6, %6 : vector<128x32xf32>
    %cst_4 = arith.constant dense<0.000000e+00> : vector<1x128xf32>
    %8 = tpu.matmul %2, %7, %cst_4 {dimension_numbers = #tpu.dot_dimension_numbers<[1], [1], [0], [0], [0, 0, 1, 0], [], []>} : vector<1x32xf32>, vector<128x32xf32>, vector<1x128xf32> -> vector<1x128xf32>
    %c0_5 = arith.constant 0 : index
    %c0_6 = arith.constant 0 : index
    %9 = vector.load %arg3[%c0_5, %c0_6] : memref<1x128xf32, #tpu.memory_space<vmem>>, vector<1x128xf32>
    tpu.vector_store %arg3[%c0_5, %c0_6], %8 {strides = array<i32>} : memref<1x128xf32, #tpu.memory_space<vmem>>, vector<1x128xf32>,
    return
  }
  func.func @transform_0(%arg0: i32) -> (i32, i32) {
    %c0_i32 = arith.constant 0 : i32
    %c0_i32_0 = arith.constant 0 : i32
    %c0_i32_1 = arith.constant 0 : i32
    return %c0_i32, %c0_i32_0 : i32, i32
  }
  func.func @transform_1(%arg0: i32) -> (i32, i32) {
    %c0_i32 = arith.constant 0 : i32
    %c0_i32_0 = arith.constant 0 : i32
    return %arg0, %c0_i32 : i32, i32
  }
  func.func @transform_2(%arg0: i32) -> (i32, i32) {
    %c0_i32 = arith.constant 0 : i32
    %c0_i32_0 = arith.constant 0 : i32
    return %c0_i32, %arg0 : i32, i32
  }
}

</mosaic_0001>

<llo_original>
// kernel: tpu_custom_call.1
$region0: #{tpu_custom_call.1}
  #allocation0 [shape = 'u32[]', space=smem, size = 0x4, offset = 0x4, fixed_abs, tag = 'smem constant byte address 0x4 - core index']
  #allocation1 [shape = 'u32[144,128]{1,0:T(1,128)}', space=vmem, size = 0x12000, scoped, tag = 'internal scratch']
  %s0 = inlined_call_operand.vmem [shape: f32[2,32], index: 0, kind: input, shape index: {}]
  %s1 = inlined_call_operand.vmem [shape: f32[128,32], index: 1, kind: input, shape index: {}]
  %s2 = inlined_call_operand.hbm [shape: f32[1,128], index: 2, kind: output, shape index: {}]
  %s3 = sld [smem:[#allocation0]]
  $region18: #{tpu_custom_call.1} parent=0
    _
  %s5 = ssub.s32 1, %s3
  %s6 = scalar_select 0, %s5, %s3
  $region1: #{tpu_custom_call.1} parent=0
    #allocation2 [shape = 'u8[512]{0}', space=vmem, size = 0x400, scoped, tag = 'output window, operand 0, single buffered']
    #allocation3 [shape = 's32[1]{0}', space=sflag, size = 0x4, scoped, tag = 'scoped memory for tpu_custom_call.1']
    %7 = vsyncpa [#allocation3], 0
    // Predicated region
    $region2: #{tpu_custom_call.1} parent=1 // pred_check
      _
    $region3: #{tpu_custom_call.1} parent=1 // pred_check_branch
      %9 = sbr.rel (0) target = $region5
    $region4: #{tpu_custom_call.1} parent=1 // pred_region
      _
    $region5: #{tpu_custom_call.1} parent=1 // pred_fallthru
      _
    // Predicated region
    $region6: #{tpu_custom_call.1} parent=1 // pred_check
      _
    $region7: #{tpu_custom_call.1} parent=1 // pred_check_branch
      %11 = sbr.rel (0) target = $region9
    $region8: #{tpu_custom_call.1} parent=1 // pred_region
      _
    $region9: #{tpu_custom_call.1} parent=1 // pred_fallthru
      _
    %v12 = vld [vmem:[%s0] sm:$0x1]
    %v13 = vmul.f32 %v12, 0.5
    %v14 = vld [vmem:[%s0 + $0x1] sm:$0x1]
    %v15 = vld [vmem:[%s1] sm:$0xff]
    %v16 = vld [vmem:[%s1 + $0x8] sm:$0xff]
    %v17 = vld [vmem:[%s1 + $0x10] sm:$0xff]
    %v18 = vld [vmem:[%s1 + $0x18] sm:$0xff]
    %v19 = vld [vmem:[%s1 + $0x20] sm:$0xff]
    %v20 = vld [vmem:[%s1 + $0x28] sm:$0xff]
    %v21 = vld [vmem:[%s1 + $0x30] sm:$0xff]
    %v22 = vld [vmem:[%s1 + $0x38] sm:$0xff]
    %v23 = vld [vmem:[%s1 + $0x40] sm:$0xff]
    %v24 = vld [vmem:[%s1 + $0x48] sm:$0xff]
    %v25 = vld [vmem:[%s1 + $0x50] sm:$0xff]
    %v26 = vld [vmem:[%s1 + $0x58] sm:$0xff]
    %v27 = vld [vmem:[%s1 + $0x60] sm:$0xff]
    %v28 = vld [vmem:[%s1 + $0x68] sm:$0xff]
    %v29 = vld [vmem:[%s1 + $0x70] sm:$0xff]
    %v30 = vld [vmem:[%s1 + $0x78] sm:$0xff]
    %v31 = vlaneseq
    %v32 = vshrl.u32 %v31, 7
    %v33 = vsub.s32 0, %v32
    %v34 = vrot.slane %v14, %v33
    %v35 = vsub.f32 %v15, %v34
    %v36 = vsub.f32 %v16, %v34
    %v37 = vsub.f32 %v17, %v34
    %v38 = vsub.f32 %v18, %v34
    %v39 = vsub.f32 %v19, %v34
    %v40 = vsub.f32 %v20, %v34
    %v41 = vsub.f32 %v21, %v34
    %v42 = vsub.f32 %v22, %v34
    %v43 = vsub.f32 %v23, %v34
    %v44 = vsub.f32 %v24, %v34
    %v45 = vsub.f32 %v25, %v34
    %v46 = vsub.f32 %v26, %v34
    %v47 = vsub.f32 %v27, %v34
    %v48 = vsub.f32 %v28, %v34
    %v49 = vsub.f32 %v29, %v34
    %v50 = vsub.f32 %v30, %v34
    %v51 = vmul.f32 %v35, %v35
    %v52 = vmul.f32 %v36, %v36
    %v53 = vmul.f32 %v37, %v37
    %v54 = vmul.f32 %v38, %v38
    %v55 = vmul.f32 %v39, %v39
    %v56 = vmul.f32 %v40, %v40
    %v57 = vmul.f32 %v41, %v41
    %v58 = vmul.f32 %v42, %v42
    %v59 = vmul.f32 %v43, %v43
    %v60 = vmul.f32 %v44, %v44
    %v61 = vmul.f32 %v45, %v45
    %v62 = vmul.f32 %v46, %v46
    %v63 = vmul.f32 %v47, %v47
    %v64 = vmul.f32 %v48, %v48
    %v65 = vmul.f32 %v49, %v49
    %v66 = vmul.f32 %v50, %v50
    %vm67 = vcmask 261120
    %v69 = vsel %vm67, %v13, 0
    %v72 = vsel %vm67, %v51, 0
    %v75 = vsel %vm67, %v52, 0
    %v78 = vsel %vm67, %v53, 0
    %v81 = vsel %vm67, %v54, 0
    %v84 = vsel %vm67, %v55, 0
    %v87 = vsel %vm67, %v56, 0
    %v90 = vsel %vm67, %v57, 0
    %v93 = vsel %vm67, %v58, 0
    %v96 = vsel %vm67, %v59, 0
    %v99 = vsel %vm67, %v60, 0
    %v102 = vsel %vm67, %v61, 0
    %v105 = vsel %vm67, %v62, 0
    %v108 = vsel %vm67, %v63, 0
    %v111 = vsel %vm67, %v64, 0
    %v114 = vsel %vm67, %v65, 0
    %v117 = vsel %vm67, %v66, 0
    %119 = vmatprep.subr.mxu0 0.0
    %120 = vmatpush1.xpose.msra.mxu0 %v117
    %121 = vmatprep.subr.mxu0 0.0
    %122 = vmatpush1.xpose.msra.mxu0 %v114
    %123 = vmatprep.subr.mxu0 0.0
    %124 = vmatpush1.xpose.msra.mxu0 %v111
    %125 = vmatprep.subr.mxu0 0.0
    %126 = vmatpush1.xpose.msra.mxu0 %v108
    %127 = vmatprep.subr.mxu0 0.0
    %128 = vmatpush1.xpose.msra.mxu0 %v105
    %129 = vmatprep.subr.mxu0 0.0
    %130 = vmatpush1.xpose.msra.mxu0 %v102
    %131 = vmatprep.subr.mxu0 0.0
    %132 = vmatpush1.xpose.msra.mxu0 %v99
    %133 = vmatprep.subr.mxu0 0.0
    %134 = vmatpush1.xpose.msra.mxu0 %v96
    %135 = vmatprep.subr.mxu0 0.0
    %136 = vmatpush1.xpose.msra.mxu0 %v93
    %137 = vmatprep.subr.mxu0 0.0
    %138 = vmatpush1.xpose.msra.mxu0 %v90
    %139 = vmatprep.subr.mxu0 0.0
    %140 = vmatpush1.xpose.msra.mxu0 %v87
    %141 = vmatprep.subr.mxu0 0.0
    %142 = vmatpush1.xpose.msra.mxu0 %v84
    %143 = vmatprep.subr.mxu0 0.0
    %144 = vmatpush1.xpose.msra.mxu0 %v81
    %145 = vmatprep.subr.mxu0 0.0
    %146 = vmatpush1.xpose.msra.mxu0 %v78
    %147 = vmatprep.subr.mxu0 0.0
    %148 = vmatpush1.xpose.msra.mxu0 %v75
    %149 = vmatprep.subr.mxu0 0.0
    %150 = vmatpush1.xpose.msra.mxu0 %v72
    %151 = vmatprep.subr.mxu0 0.0
    %152 = vmatpush2.xpose.msra.mxu0 0.0
    %153 = vmatprep.subr.mxu0 0.0
    %154 = vmatpush2.xpose.msra.mxu0 0.0
    %155 = vmatprep.subr.mxu0 0.0
    %156 = vmatpush2.xpose.msra.mxu0 0.0
    %157 = vmatprep.subr.mxu0 0.0
    %158 = vmatpush2.xpose.msra.mxu0 0.0
    %159 = vmatprep.subr.mxu0 0.0
    %160 = vmatpush2.xpose.msra.mxu0 0.0
    %161 = vmatprep.subr.mxu0 0.0
    %162 = vmatpush2.xpose.msra.mxu0 0.0
    %163 = vmatprep.subr.mxu0 0.0
    %164 = vmatpush2.xpose.msra.mxu0 0.0
    %165 = vmatprep.subr.mxu0 0.0
    %166 = vmatpush2.xpose.msra.mxu0 0.0
    %167 = vmatprep.subr.mxu0 0.0
    %168 = vmatpush2.xpose.msra.mxu0 0.0
    %169 = vmatprep.subr.mxu0 0.0
    %170 = vmatpush2.xpose.msra.mxu0 0.0
    %171 = vmatprep.subr.mxu0 0.0
    %172 = vmatpush2.xpose.msra.mxu0 0.0
    %173 = vmatprep.subr.mxu0 0.0
    %174 = vmatpush2.xpose.msra.mxu0 0.0
    %175 = vmatprep.subr.mxu0 0.0
    %176 = vmatpush2.xpose.msra.mxu0 0.0
    %177 = vmatprep.subr.mxu0 0.0
    %178 = vmatpush2.xpose.msra.mxu0 0.0
    %179 = vmatprep.subr.mxu0 0.0
    %180 = vmatpush2.xpose.msra.mxu0 0.0
    %181 = vmatprep.subr.mxu0 0.0
    %182 = vmatpush2.xpose.msra.mxu0 0.0
    %183 = vmatprep.mubr.f32.mxu0 0.0
    %184 = vmatmul.mubr.f32.gmra.mxu0 %v69
    %v185 = vpop.f32.mrf.mxu0
    %v186 = vadd.f32 0.0, %v185
    %v187 = vpop.f32.mrf.mxu0
    %188 = vdwg.mxu0
    %189 = vst [vmem:[#allocation2] sm:$0x1] %v186
    // Predicated region
    $region10: #{tpu_custom_call.1} parent=1 // pred_check
      _
    $region11: #{tpu_custom_call.1} parent=1 // pred_check_branch
      %191 = sbr.rel (0) target = $region13
    $region12: #{tpu_custom_call.1} parent=1 // pred_region
      %s193 = ssub.s32 16, 16
      %194 = vsyncadd [#allocation3], %s193
      %s196 = sshll.u32 [#allocation2], 4
      %s197 = int_to_ptr.vmem [resolvable:$true] %s196
      %199 = dma.vmem_to_hbm [thread:$0]  %s197, 16, %s2, [#allocation3]
    $region13: #{tpu_custom_call.1} parent=1 // pred_fallthru
      _
    // Predicated region
    $region14: #{tpu_custom_call.1} parent=1 // pred_check
      _
    $region15: #{tpu_custom_call.1} parent=1 // pred_check_branch
      %201 = sbr.rel (0) target = $region17
    $region16: #{tpu_custom_call.1} parent=1 // pred_region
      %202 = dma.done [#allocation3], 16
    $region17: #{tpu_custom_call.1} parent=1 // pred_fallthru
      _
    %203 = vsyncpa [#allocation3], 1

</llo_original>
